<compile_context>
chip_gen: v5e
topology: v5e:2x2
jax: 0.10.0
libtpu: 0.0.40
codegen_flags: <defaults>
</compile_context>

<pallas_src>
import functools

import jax
import jax.numpy as jnp
from jax.experimental import pallas as pl
from jax.experimental.pallas import tpu as pltpu


def _dma_copy_kernel(x_hbm, o_hbm, sems, *, chunks):
    """Direct HBM->HBM copy in a few large chunks (start all, then wait all)."""
    copies = []
    for i, (start, size) in enumerate(chunks):
        cp = pltpu.make_async_copy(
            x_hbm.at[pl.ds(start, size), :],
            o_hbm.at[pl.ds(start, size), :],
            sems.at[i],
        )
        cp.start()
        copies.append(cp)
    for cp in copies:
        cp.wait()


def _pick_lane(total):
    """Largest lane width (multiple of 128, capped at 2048) dividing `total`."""
    for cand in (2048, 1024, 512, 256, 128):
        if total % cand == 0:
            return cand
    return None


def _make_chunks(rows, itemsize, max_chunks=8):
    """Split `rows` into <= max_chunks contiguous, sublane-aligned chunks."""
    # Sublane-aligned row multiple: 8 for f32, 16 for bf16, 32 for int8/fp8.
    sub = max(1, 32 // itemsize)
    n_groups = pl.cdiv(rows, sub)
    k = int(min(max_chunks, n_groups))
    base = pl.cdiv(n_groups, k) * sub  # rows per chunk (sublane-aligned)
    chunks = []
    start = 0
    while start < rows:
        size = min(base, rows - start)
        chunks.append((start, size))
        start += size
    return tuple(chunks)


def channel_to_logits_transpose(x, Cout, Lout, *, materialize=False):
    """x: (N, C, H, W) with C == Lout * Cout  ->  (N, Lout, Cout, H, W).

    materialize=False (default): metadata-only reshape (fastest — zero copy).
    materialize=True: force a materialized copy via a Pallas HBM->HBM DMA
    kernel (useful only if the caller needs a fresh buffer).
    """
    N, C, H, W = x.shape
    assert C == Lout * Cout, f"C={C} must equal Lout*Cout={Lout * Cout}"
    out_shape = (N, Lout, Cout, H, W)

    if not materialize:
        # Pure contiguous view: zero HBM traffic.  This is the fastest path on
        # every TPU generation.
        return jnp.reshape(x, out_shape)

    total = N * C * H * W
    lane = _pick_lane(total)
    if lane is None:
        # Not 128-divisible: the view is exact anyway; no kernel needed.
        return jnp.reshape(x, out_shape)

    rows = total // lane
    itemsize = jnp.dtype(x.dtype).itemsize
    chunks = _make_chunks(rows, itemsize)

    # Lane-dense 2-D view of the same flat byte order (metadata-only reshape).
    x2d = jnp.reshape(x, (rows, lane))

    out2d = pl.pallas_call(
        functools.partial(_dma_copy_kernel, chunks=chunks),
        out_shape=jax.ShapeDtypeStruct((rows, lane), x.dtype),
        # Raw HBM refs on both sides — no VMEM staging, no grid pipeline.
        in_specs=[pl.BlockSpec(memory_space=pl.ANY)],
        out_specs=pl.BlockSpec(memory_space=pl.ANY),
        scratch_shapes=[pltpu.SemaphoreType.DMA((len(chunks),))],
        # Accurate hint for XLA's scheduler: pure read+write of the tensor.
        cost_estimate=pl.CostEstimate(
            flops=0, transcendentals=0, bytes_accessed=2 * total * itemsize
        ),
    )(x2d)

    # Metadata-only reshape back to the logical (N, Lout, Cout, H, W) view.
    return jnp.reshape(out2d, out_shape)


if __name__ == "__main__":
    # Small shapes consistent with the module: N=2, C=4 (Lout=2, Cout=2), H=W=16
    N, C, H, W = 2, 4, 16, 16
    Cout, Lout = 2, 2

    key = jax.random.PRNGKey(0)
    x = jax.random.normal(key, (N, C, H, W), dtype=jnp.float32)

    # Reference: the PyTorch .view semantics (contiguous reshape).
    ref = jnp.reshape(x, (N, Lout, Cout, H, W))

    # Default fast path: zero-copy view.
    out_view = jax.block_until_ready(channel_to_logits_transpose(x, Cout, Lout))
    assert out_view.shape == (N, Lout, Cout, H, W)
    assert out_view.dtype == x.dtype
    assert jnp.array_equal(out_view, ref), "view path mismatch vs reference"

    # Materialized path: exercises the Pallas HBM->HBM DMA copy kernel.
    out_copy = jax.block_until_ready(
        channel_to_logits_transpose(x, Cout, Lout, materialize=True)
    )
    assert out_copy.shape == (N, Lout, Cout, H, W)
    assert out_copy.dtype == x.dtype
    assert jnp.array_equal(out_copy, ref), "Pallas DMA output mismatch vs reference"

    print("KERNEL_OK")
</pallas_src>

<mosaic_0001>
module attributes {stable_mosaic.version = 11 : i64} {
  func.func @_dma_copy_kernel(%arg0: memref<1x2048xf32, #tpu.memory_space<any>>, %arg1: memref<1x2048xf32, #tpu.memory_space<any>>, %arg2: memref<1x!tpu.dma_semaphore, #tpu.memory_space<semaphore_mem>>) attributes {dimension_semantics = [], scalar_prefetch = 0 : i64, scratch_operands = 1 : i64, tpu.core_type = #tpu.core_type<tc>} {
    %c0_i32 = arith.constant 0 : i32
    %c0_i32_0 = arith.constant 0 : i32
    %c0_i32_1 = arith.constant 0 : i32
    %0 = tpu.memref_slice %arg0[%c0_i32_0, %c0_i32_1] : memref<1x2048xf32, #tpu.memory_space<any>> -> memref<1x2048xf32, #tpu.memory_space<any>>
    %c0_i32_2 = arith.constant 0 : i32
    %c0_i32_3 = arith.constant 0 : i32
    %1 = tpu.memref_slice %arg1[%c0_i32_2, %c0_i32_3] : memref<1x2048xf32, #tpu.memory_space<any>> -> memref<1x2048xf32, #tpu.memory_space<any>>
    %2 = tpu.memref_slice %arg2[%c0_i32] : memref<1x!tpu.dma_semaphore, #tpu.memory_space<semaphore_mem>> -> memref<1x!tpu.dma_semaphore, #tpu.memory_space<semaphore_mem>>
    %3 = tpu.memref_squeeze %2 : memref<1x!tpu.dma_semaphore, #tpu.memory_space<semaphore_mem>> -> memref<!tpu.dma_semaphore, #tpu.memory_space<semaphore_mem>>
    tpu.enqueue_dma source(%0 : memref<1x2048xf32, #tpu.memory_space<any>>) target(%1 : memref<1x2048xf32, #tpu.memory_space<any>>) target_semaphore(%3 : memref<!tpu.dma_semaphore, #tpu.memory_space<semaphore_mem>>)
    %c0_i32_4 = arith.constant 0 : i32
    %c0_i32_5 = arith.constant 0 : i32
    %c0_i32_6 = arith.constant 0 : i32
    %4 = tpu.memref_slice %arg0[%c0_i32_5, %c0_i32_6] : memref<1x2048xf32, #tpu.memory_space<any>> -> memref<1x2048xf32, #tpu.memory_space<any>>
    %c0_i32_7 = arith.constant 0 : i32
    %c0_i32_8 = arith.constant 0 : i32
    %5 = tpu.memref_slice %arg1[%c0_i32_7, %c0_i32_8] : memref<1x2048xf32, #tpu.memory_space<any>> -> memref<1x2048xf32, #tpu.memory_space<any>>
    %6 = tpu.memref_slice %arg2[%c0_i32_4] : memref<1x!tpu.dma_semaphore, #tpu.memory_space<semaphore_mem>> -> memref<1x!tpu.dma_semaphore, #tpu.memory_space<semaphore_mem>>
    %7 = tpu.memref_squeeze %6 : memref<1x!tpu.dma_semaphore, #tpu.memory_space<semaphore_mem>> -> memref<!tpu.dma_semaphore, #tpu.memory_space<semaphore_mem>>
    tpu.wait_dma2 semaphore(%7 : memref<!tpu.dma_semaphore, #tpu.memory_space<semaphore_mem>>) src(%4 : memref<1x2048xf32, #tpu.memory_space<any>>) dst(%5 : memref<1x2048xf32, #tpu.memory_space<any>>)
    return
  }
}

</mosaic_0001>

<llo_original>
// kernel: tpu_custom_call.1
$region0: #{tpu_custom_call.1}
  #allocation0 [shape = 'u32[]', space=smem, size = 0x4, offset = 0x4, fixed_abs, tag = 'smem constant byte address 0x4 - core index']
  #allocation1 [shape = 'u32[72,128]{1,0:T(1,128)}', space=vmem, size = 0x9000, scoped, tag = 'internal scratch']
  #allocation2 [shape = 's32[1]{0}', space=sflag, size = 0x4, scoped, tag = 'scratch operand']
  #allocation3 [shape = 's32[]', space=sflag, size = 0x4, offset = 0, fixed_abs, tag = 'sflag constant byte address 0x0 - dummy sync flag']
  #allocation4 [shape = 'u32[0]{0}', space=smem, size = 0, offset = 0, fixed_abs, tag = 'smem constant byte address 0x0 - null']
  %s0 = inlined_call_operand.hbm [shape: f32[1,2048], index: 0, kind: input, shape index: {}]
  %s1 = inlined_call_operand.hbm [shape: f32[1,2048], index: 1, kind: output, shape index: {}]
  %s2 = sld [smem:[#allocation0]]
  $region2: #{tpu_custom_call.1} parent=0
    _
  %s4 = ssub.s32 1, %s2
  %s5 = scalar_select 0, %s4, %s2
  %s7 = sshll.u32 1, 14
  %s8 = sxor.u32 4294967295, %s7
  %s10 = sshll.u32 %s0, 4
  %s11 = int_to_ptr.hbm [resolvable:$true] %s10
  %s12 = sshll.u32 %s1, 4
  %s13 = int_to_ptr.hbm [resolvable:$true] %s12
  %16 = dma.general %s11, 256, %s13, [#allocation2], [#allocation3], [#allocation4], 0, 0
  %s17 = smul.u32 1, 16
  %s18 = sshll.u32 %s17, 4
  %19 = dma.done [#allocation2], %s18
  %20 = vsyncmov [#allocation2]
  %s21 = vpop.sfrf %20
  %p22 = scmp.eq.s32.totalorder %s21, 0
  %p23 = pneg %p22
  %25 = shalt.err (%p23)

</llo_original>
